<compile_context>
chip_gen: v7x
topology: tpu7x:2x2x1
jax: 0.10.0
libtpu: 0.0.40
codegen_flags: <defaults>
</compile_context>

<pallas_src>
import functools

import jax
import jax.numpy as jnp
import numpy as np
from jax.experimental import pallas as pl
from jax.experimental.pallas import tpu as pltpu

LANE = 128      # output feature dim padded to a multiple of this (lane axis)
SUBLANE = 8     # batch tile must be a multiple of this (sublane axis)


def _round_up(x, m):
    return ((x + m - 1) // m) * m


def _linear_kernel(x_ref, wt_ref, b_ref, o_ref):
    # x_ref : [TM, K]      (VMEM)  batch tile (f32 or bf16)
    # wt_ref: [K, N_pad]   (VMEM)  weight, pre-transposed, lane-padded
    # b_ref : [1, N_pad]   (VMEM)  bias, f32
    # o_ref : [TM, N_pad]  (VMEM)  lane-dense f32 output tile
    acc = jnp.dot(x_ref[...], wt_ref[...], preferred_element_type=jnp.float32)
    o_ref[...] = (acc + b_ref[...]).astype(o_ref.dtype)


def init_params(key, n_inputs, n_outputs):
    """kaiming_normal_ (fan_in, gain sqrt(2)) on weight; bias = 0.
    Matches init_weights() applied to nn.Linear in the PyTorch module."""
    std = float(np.sqrt(2.0 / n_inputs))
    weight = jax.random.normal(key, (n_outputs, n_inputs), dtype=jnp.float32) * std
    bias = jnp.zeros((n_outputs,), dtype=jnp.float32)
    return weight, bias


def prepare_params(weight, bias, *, use_bf16=False):
    """One-time re-layout of the nn.Linear parameters for the kernel.

    weight: [n_out, n_in] (PyTorch convention) -> wt: [n_in, N_pad]
    (transposed, zero-padded so N_pad is a multiple of 128).
    bias -> [1, N_pad] float32.
    Doing this once at init keeps transpose/reshape/pad ops out of the
    per-call forward path.
    """
    n_out, n_in = weight.shape
    n_pad = _round_up(n_out, LANE)
    w_dtype = jnp.bfloat16 if use_bf16 else jnp.float32
    wt = jnp.zeros((n_in, n_pad), w_dtype).at[:, :n_out].set(weight.T.astype(w_dtype))
    b = jnp.zeros((1, n_pad), jnp.float32).at[:, :n_out].set(bias.astype(jnp.float32))
    return wt, b, n_out


@functools.partial(jax.jit, static_argnums=(3,),
                   static_argnames=("block_b", "force_pallas"))
def dqn_forward(x, wt, b, n_out, *, block_b=256, force_pallas=False):
    """Forward pass of DQNModel (single Linear layer).

    x : [B, n_in] (any float dtype; cast to f32, mirroring inputs.float())
    wt: [n_in, N_pad]  pre-transposed / padded weight from prepare_params()
    b : [1,   N_pad]   padded bias from prepare_params()
    returns [B, n_out] float32
    """
    x = x.astype(jnp.float32)
    B, n_in = x.shape
    K, n_pad = wt.shape
    assert K == n_in, "input feature dim mismatch"

    # Tiny-problem fallback: below ~one (8,128) tile of useful work the Pallas
    # launch + DMA overhead dominates; let XLA fuse a plain matmul instead.
    if not force_pallas and (B < SUBLANE or B * n_in * n_pad < 8 * 128 * 128):
        out = jnp.dot(x, wt.astype(jnp.float32),
                      preferred_element_type=jnp.float32) + b
        return out[:, :n_out]

    # Batch tiling for pipelining; TM multiple of 8 (sublane), capped for VMEM.
    tm = min(block_b, _round_up(B, SUBLANE))
    b_pad = _round_up(B, tm)

    # Match x dtype to the prepared weight dtype (bf16 MXU path if requested).
    x_dtype = wt.dtype
    xp = jnp.zeros((b_pad, n_in), x_dtype).at[:B, :].set(x.astype(x_dtype))

    grid = (b_pad // tm,)
    out = pl.pallas_call(
        _linear_kernel,
        out_shape=jax.ShapeDtypeStruct((b_pad, n_pad), jnp.float32),
        grid_spec=pl.GridSpec(
            grid=grid,
            in_specs=[
                pl.BlockSpec((tm, n_in), lambda i: (i, 0)),     # x batch tile
                pl.BlockSpec((n_in, n_pad), lambda i: (0, 0)),  # full weight
                pl.BlockSpec((1, n_pad), lambda i: (0, 0)),     # full bias
            ],
            out_specs=pl.BlockSpec((tm, n_pad), lambda i: (i, 0)),
        ),
        compiler_params=pltpu.CompilerParams(
            # batch axis is independent -> shard across v7x's 2 TensorCores
            dimension_semantics=("parallel",),
        ),
    )(xp, wt, b)

    return out[:B, :n_out]


if __name__ == "__main__":
    # Shapes implied by the module:
    #   n_inputs  = env.observation_space.shape[0]  -> 4
    #   n_outputs = len(discrete_actions)           -> 8
    #   batch                                       -> 2
    B, n_inputs, n_outputs = 2, 4, 8

    key = jax.random.PRNGKey(0)
    k_w, k_x, k_xb = jax.random.split(key, 3)

    weight, bias = init_params(k_w, n_inputs, n_outputs)
    wt, b_p, n_out = prepare_params(weight, bias, use_bf16=False)

    # --- Case 1: the module's own tiny shapes; force the Pallas path so the
    #             kernel itself is exercised and checked. ---
    x_small = jax.random.normal(k_x, (B, n_inputs), dtype=jnp.float32)
    out_small = jax.block_until_ready(
        dqn_forward(x_small, wt, b_p, n_out, force_pallas=True))
    ref_small = x_small @ weight.T + bias
    np.testing.assert_allclose(np.asarray(out_small), np.asarray(ref_small),
                               rtol=1e-5, atol=1e-5)

    # --- Case 2: replay-buffer-style batch, exercises the tiled (grid > 1),
    #             pipelined, batch-parallel path. ---
    B_big = 512
    x_big = jax.random.normal(k_xb, (B_big, n_inputs), dtype=jnp.float32)
    out_big = jax.block_until_ready(
        dqn_forward(x_big, wt, b_p, n_out, block_b=256))
    ref_big = x_big @ weight.T + bias
    np.testing.assert_allclose(np.asarray(out_big), np.asarray(ref_big),
                               rtol=1e-5, atol=1e-5)

    print("KERNEL_OK")
</pallas_src>

<mosaic_0001>
module attributes {stable_mosaic.version = 11 : i64} {
  func.func @_linear_kernel(%arg0: i32, %arg1: memref<8x4xf32, #tpu.memory_space<vmem>>, %arg2: memref<4x128xf32, #tpu.memory_space<vmem>>, %arg3: memref<1x128xf32, #tpu.memory_space<vmem>>, %arg4: memref<8x128xf32, #tpu.memory_space<vmem>>) attributes {dimension_semantics = [#tpu.dimension_semantics<parallel>], iteration_bounds = array<i64: 1>, scalar_prefetch = 0 : i64, scratch_operands = 0 : i64, tpu.core_type = #tpu.core_type<tc>, window_params = [{transform_indices = @transform_0, window_bounds = array<i64: 8, 4>}, {pipeline_mode = #tpu.pipeline_mode<synchronous>, transform_indices = @transform_1, window_bounds = array<i64: 4, 128>}, {pipeline_mode = #tpu.pipeline_mode<synchronous>, transform_indices = @transform_2, window_bounds = array<i64: 1, 128>}, {transform_indices = @transform_3, window_bounds = array<i64: 8, 128>}]} {
    %c0 = arith.constant 0 : index
    %c0_0 = arith.constant 0 : index
    %0 = vector.load %arg1[%c0, %c0_0] : memref<8x4xf32, #tpu.memory_space<vmem>>, vector<8x4xf32>
    %c0_1 = arith.constant 0 : index
    %c0_2 = arith.constant 0 : index
    %1 = vector.load %arg2[%c0_1, %c0_2] : memref<4x128xf32, #tpu.memory_space<vmem>>, vector<4x128xf32>
    %cst = arith.constant dense<0.000000e+00> : vector<8x128xf32>
    %2 = tpu.matmul %0, %1, %cst {dimension_numbers = #tpu.dot_dimension_numbers<[1], [0], [0], [1], [0, 0, 1, 1], [], []>} : vector<8x4xf32>, vector<4x128xf32>, vector<8x128xf32> -> vector<8x128xf32>
    %c0_3 = arith.constant 0 : index
    %c0_4 = arith.constant 0 : index
    %3 = vector.load %arg3[%c0_3, %c0_4] : memref<1x128xf32, #tpu.memory_space<vmem>>, vector<1x128xf32>
    %4 = vector.broadcast %3 : vector<1x128xf32> to vector<8x128xf32>
    %5 = arith.addf %2, %4 : vector<8x128xf32>
    %c0_5 = arith.constant 0 : index
    %c0_6 = arith.constant 0 : index
    %6 = vector.load %arg4[%c0_5, %c0_6] : memref<8x128xf32, #tpu.memory_space<vmem>>, vector<8x128xf32>
    tpu.vector_store %arg4[%c0_5, %c0_6], %5 {strides = array<i32>} : memref<8x128xf32, #tpu.memory_space<vmem>>, vector<8x128xf32>,
    return
  }
  func.func @transform_0(%arg0: i32) -> (i32, i32) {
    %c0_i32 = arith.constant 0 : i32
    %c0_i32_0 = arith.constant 0 : i32
    return %arg0, %c0_i32 : i32, i32
  }
  func.func @transform_1(%arg0: i32) -> (i32, i32) {
    %c0_i32 = arith.constant 0 : i32
    %c0_i32_0 = arith.constant 0 : i32
    %c0_i32_1 = arith.constant 0 : i32
    return %c0_i32, %c0_i32_0 : i32, i32
  }
  func.func @transform_2(%arg0: i32) -> (i32, i32) {
    %c0_i32 = arith.constant 0 : i32
    %c0_i32_0 = arith.constant 0 : i32
    %c0_i32_1 = arith.constant 0 : i32
    return %c0_i32, %c0_i32_0 : i32, i32
  }
  func.func @transform_3(%arg0: i32) -> (i32, i32) {
    %c0_i32 = arith.constant 0 : i32
    %c0_i32_0 = arith.constant 0 : i32
    return %arg0, %c0_i32 : i32, i32
  }
}

</mosaic_0001>

<llo_original>
// kernel: dqn_forward.1
$region0: #{dqn_forward.1}
  #allocation0 [shape = 'u32[]', space=smem, size = 0x4, offset = 0x4, fixed_abs, tag = 'smem constant byte address 0x4 - core index']
  #allocation1 [shape = 'u32[144,128]{1,0:T(1,128)}', space=vmem, size = 0x12000, scoped, tag = 'internal scratch']
  %s0 = inlined_call_operand.vmem [shape: f32[8,4], index: 0, kind: input, shape index: {}]
  %s1 = inlined_call_operand.vmem [shape: f32[4,128], index: 1, kind: input, shape index: {}]
  %s2 = inlined_call_operand.vmem [shape: f32[1,128], index: 2, kind: input, shape index: {}]
  %s3 = inlined_call_operand.vmem [shape: f32[8,128], index: 3, kind: output, shape index: {}]
  %s4 = sld [smem:[#allocation0]]
  $region22: #{dqn_forward.1} parent=0
    _
  %s6 = ssub.s32 1, %s4
  %s7 = scalar_select 0, %s6, %s4
  // Predicated region
  $region2: #{dqn_forward.1} parent=0 // pred_check
    _
  $region3: #{dqn_forward.1} parent=0 // pred_check_branch
    %9 = sbr.rel (0) target = $region5
  $region4: #{dqn_forward.1} parent=0 // pred_region
    _
  $region5: #{dqn_forward.1} parent=0 // pred_fallthru
    _
  // Predicated region
  $region6: #{dqn_forward.1} parent=0 // pred_check
    _
  $region7: #{dqn_forward.1} parent=0 // pred_check_branch
    %11 = sbr.rel (0) target = $region9
  $region8: #{dqn_forward.1} parent=0 // pred_region
    _
  $region9: #{dqn_forward.1} parent=0 // pred_fallthru
    _
  // Predicated region
  $region10: #{dqn_forward.1} parent=0 // pred_check
    _
  $region11: #{dqn_forward.1} parent=0 // pred_check_branch
    %13 = sbr.rel (0) target = $region13
  $region12: #{dqn_forward.1} parent=0 // pred_region
    _
  $region13: #{dqn_forward.1} parent=0 // pred_fallthru
    _
  %v14 = vld [vmem:[%s0] sm:$0xff]
  %v15 = vld [vmem:[%s1] sm:$0xf]
  %v16 = vld [vmem:[%s2] sm:$0x1]
  %v18 = vlaneseq
  %v19 = vshrl.u32 %v18, 7
  %v20 = vsub.s32 0, %v19
  %v21 = vrot.slane %v16, %v20
  %vm23 = vcmask 31744
  %v25 = vsel %vm23, %v14, 0
  %vm27 = vcmask 1043456
  %v29 = vsel %vm27, %v15, 0
  %31 = vmatprep.subr.mxu0 0.0
  %32 = vmatpush1.msra.mxu0 %v29
  %33 = vmatprep.subr.mxu0 0.0
  %34 = vmatpush1.msra.mxu0 0.0
  %35 = vmatprep.subr.mxu0 0.0
  %36 = vmatpush1.msra.mxu0 0.0
  %37 = vmatprep.subr.mxu0 0.0
  %38 = vmatpush1.msra.mxu0 0.0
  %39 = vmatprep.subr.mxu0 0.0
  %40 = vmatpush1.msra.mxu0 0.0
  %41 = vmatprep.subr.mxu0 0.0
  %42 = vmatpush1.msra.mxu0 0.0
  %43 = vmatprep.subr.mxu0 0.0
  %44 = vmatpush1.msra.mxu0 0.0
  %45 = vmatprep.subr.mxu0 0.0
  %46 = vmatpush1.msra.mxu0 0.0
  %47 = vmatprep.subr.mxu0 0.0
  %48 = vmatpush1.msra.mxu0 0.0
  %49 = vmatprep.subr.mxu0 0.0
  %50 = vmatpush1.msra.mxu0 0.0
  %51 = vmatprep.subr.mxu0 0.0
  %52 = vmatpush1.msra.mxu0 0.0
  %53 = vmatprep.subr.mxu0 0.0
  %54 = vmatpush1.msra.mxu0 0.0
  %55 = vmatprep.subr.mxu0 0.0
  %56 = vmatpush1.msra.mxu0 0.0
  %57 = vmatprep.subr.mxu0 0.0
  %58 = vmatpush1.msra.mxu0 0.0
  %59 = vmatprep.subr.mxu0 0.0
  %60 = vmatpush1.msra.mxu0 0.0
  %61 = vmatprep.subr.mxu0 0.0
  %62 = vmatpush1.msra.mxu0 0.0
  %63 = vmatprep.subr.mxu0 0.0
  %64 = vmatpush1.msra.mxu0 0.0
  %65 = vmatprep.subr.mxu0 0.0
  %66 = vmatpush1.msra.mxu0 0.0
  %67 = vmatprep.subr.mxu0 0.0
  %68 = vmatpush1.msra.mxu0 0.0
  %69 = vmatprep.subr.mxu0 0.0
  %70 = vmatpush1.msra.mxu0 0.0
  %71 = vmatprep.subr.mxu0 0.0
  %72 = vmatpush1.msra.mxu0 0.0
  %73 = vmatprep.subr.mxu0 0.0
  %74 = vmatpush1.msra.mxu0 0.0
  %75 = vmatprep.subr.mxu0 0.0
  %76 = vmatpush1.msra.mxu0 0.0
  %77 = vmatprep.subr.mxu0 0.0
  %78 = vmatpush1.msra.mxu0 0.0
  %79 = vmatprep.subr.mxu0 0.0
  %80 = vmatpush1.msra.mxu0 0.0
  %81 = vmatprep.subr.mxu0 0.0
  %82 = vmatpush1.msra.mxu0 0.0
  %83 = vmatprep.subr.mxu0 0.0
  %84 = vmatpush1.msra.mxu0 0.0
  %85 = vmatprep.subr.mxu0 0.0
  %86 = vmatpush1.msra.mxu0 0.0
  %87 = vmatprep.subr.mxu0 0.0
  %88 = vmatpush1.msra.mxu0 0.0
  %89 = vmatprep.subr.mxu0 0.0
  %90 = vmatpush1.msra.mxu0 0.0
  %91 = vmatprep.subr.mxu0 0.0
  %92 = vmatpush1.msra.mxu0 0.0
  %93 = vmatprep.subr.mxu0 0.0
  %94 = vmatpush1.msra.mxu0 0.0
  %95 = vmatprep.mubr.f32.mxu0 0.0
  %96 = vmatmul.mubr.f32.gmra.mrb[0].mxu0 %v25
  %v97 = vpop.f32.mrb[0].mxu0
  %v98 = vadd.f32 %v21, %v97
  %v99 = vpop.f32.mrb[0].mxu0
  %100 = vdwg.mxu0
  %101 = vst [vmem:[%s3] sm:$0xff] %v98
  // Predicated region
  $region14: #{dqn_forward.1} parent=0 // pred_check
    _
  $region15: #{dqn_forward.1} parent=0 // pred_check_branch
    %103 = sbr.rel (0) target = $region17
  $region16: #{dqn_forward.1} parent=0 // pred_region
    _
  $region17: #{dqn_forward.1} parent=0 // pred_fallthru
    _
  // Predicated region
  $region18: #{dqn_forward.1} parent=0 // pred_check
    _
  $region19: #{dqn_forward.1} parent=0 // pred_check_branch
    %105 = sbr.rel (0) target = $region21
  $region20: #{dqn_forward.1} parent=0 // pred_region
    _
  $region21: #{dqn_forward.1} parent=0 // pred_fallthru
    _

</llo_original>
